<compile_context>
chip_gen: v6e
topology: v6e:2x2x1
jax: 0.10.0
libtpu: 0.0.40
codegen_flags: <defaults>
</compile_context>

<pallas_src>
import functools

import numpy as np

import jax
import jax.numpy as jnp
from jax.experimental import pallas as pl
from jax.experimental.pallas import tpu as pltpu


# Elementwise compute dtype for the 9-neighbour window path.  bf16 halves VALU / vld / vst /
# XLU-roll pressure on v6e / v7x; v5e has no packed-bf16 VPU, so set this to jnp.float32 there
# (the rolls still operate on the bf16 frames and the MXU operands stay bf16 either way).
_ELEMWISE_DTYPE = jnp.bfloat16


# ----------------------------- Pallas kernel ----------------------------- #
def _agg_attn_kernel(qn_ref, k_ref, v_ref, scale_ref, qe_ref, locb_ref,
                     kp_ref, vpT_ref, pb_ref, tok_ref, lb_ref, out_ref, *, shifts):
    """Fused AggregatedAttention core for one (batch, head) pair.

    Channel-major layout: (head_dim | local_len | pool_len, NE) with the lane-aligned padded
    frame token axis NE on lanes.  `shifts` are static lane-roll amounts realizing the
    window_size**2 neighbour offsets on the padded K/V frames.
    """
    f32 = jnp.float32
    bf16 = jnp.bfloat16
    et = _ELEMWISE_DTYPE
    D = qn_ref.shape[0]

    # q_scaled formed in-kernel: (q_norm + query_embedding) * softplus(temp) * seq_len_scale.
    # The scale frame is zero on halo / margin lanes, so q_s stays exactly zero there.
    q_n = qn_ref[...]                                                     # (D, NE) bf16
    q_s = (q_n.astype(et) + qe_ref[...].astype(et)) * scale_ref[...].astype(et)
    k_m = k_ref[...]                                                      # (D, NE) bf16
    v_m = v_ref[...]                                                      # (D, NE) bf16

    def shifted(x, sh):
        return x if sh == 0 else pltpu.roll(x, shift=sh, axis=1)

    # --- local similarities: bf16 product per neighbour, D-axis reduction on the MXU via a
    #     (1, D) ones-row dot; results stacked into one (L, NE) f32 tensor ---------------- #
    ones_row = jnp.ones((1, D), et)
    loc_rows = []
    for sh in shifts:
        prod = q_s * shifted(k_m, sh).astype(et)                          # (D, NE) packed VPU
        loc_rows.append(jax.lax.dot_general(
            ones_row, prod, (((1,), (0,)), ((), ())),
            preferred_element_type=f32))                                  # (1, NE) f32
    # locb carries the relative-position bias + the -1e30 padding mask (kept in f32 logits).
    loc = jnp.concatenate(loc_rows, axis=0) + locb_ref[...]               # (L, NE) f32

    # --- pooled similarity on the MXU: bf16 x bf16 -> f32 acc, plus cpb bias -------------- #
    attn_pool = jax.lax.dot_general(
        kp_ref[...], q_s.astype(bf16), (((1,), (0,)), ((), ())),
        preferred_element_type=f32) + pb_ref[...].astype(f32)             # (P, NE)

    # --- joint softmax over [local_len + pool_len]: logits / exp / denominator all f32 ---- #
    m = jnp.maximum(jnp.max(loc, axis=0, keepdims=True),
                    jnp.max(attn_pool, axis=0, keepdims=True))            # (1, NE)
    e_loc = jnp.exp(loc - m)                                              # (L, NE)
    e_pool = jnp.exp(attn_pool - m)                                       # (P, NE)
    denom = (jnp.sum(e_loc, axis=0, keepdims=True)
             + jnp.sum(e_pool, axis=0, keepdims=True))
    inv = pl.reciprocal(denom, approx=True)                               # EUP, (1, NE)

    # --- pooled AV on the MXU (bf16 weights, flash-style); normalization deferred --------- #
    acc = jax.lax.dot_general(
        vpT_ref[...], e_pool.astype(bf16), (((1,), (0,)), ((), ())),
        preferred_element_type=f32) * inv                                 # (D, NE) f32

    # --- query-dependent local weights, computed once before the V loop:
    #     w = (q_norm @ learnable_tokens) + learnable_bias + softmax_local ----------------- #
    dyn = jax.lax.dot_general(
        tok_ref[...], q_n, (((1,), (0,)), ((), ())),
        preferred_element_type=f32) + lb_ref[...]                         # (L, NE) f32
    w = (dyn + e_loc * inv).astype(et)                                    # (L, NE)

    # --- local aggregation: bf16 multiply against rolled bf16 V, f32 accumulate ----------- #
    for l, sh in enumerate(shifts):
        acc = acc + w[l:l + 1, :] * shifted(v_m, sh).astype(et)

    out_ref[...] = acc.astype(out_ref.dtype)                              # bf16 writeback


def agg_attn_pallas(prep, *, shifts):
    qn, k, v = prep["qn"], prep["k"], prep["v"]
    scale, qe, locb = prep["scale"], prep["qe"], prep["locb"]
    kp, vpT, pb, tok, lb = prep["kp"], prep["vpT"], prep["pb"], prep["tok"], prep["lb"]
    B, NH, D, NE = qn.shape
    L = locb.shape[1]
    P = kp.shape[2]

    kern = functools.partial(_agg_attn_kernel, shifts=tuple(int(s) for s in shifts))

    # v7x: the larger extent leads so the 2 TensorCores split the grid evenly; when heads lead
    # the per-head operands (hh specs) are constant along the inner axis -> no re-DMA.
    if NH >= B:
        grid = (NH, B)
        bh = lambda h, b: (b, h, 0, 0)
        hh = lambda h, b: (h, 0, 0)
    else:
        grid = (B, NH)
        bh = lambda b, h: (b, h, 0, 0)
        hh = lambda b, h: (h, 0, 0)

    # VMEM budget from the actual working set: double-buffered ins/outs + f32 temporaries +
    # slack, clamped to [16 MiB, 40 MiB] so there is headroom even on v7x's 64 MiB VMEM.
    bfb, f32b = 2, 4
    in_bytes = ((3 * D * NE + NE + D + P * D + D * P + P * NE + L * D) * bfb
                + (L * NE + L) * f32b)
    out_bytes = D * NE * bfb
    tmp_bytes = (2 * D * NE + 3 * P * NE + 4 * L * NE + 8 * NE) * f32b + 2 * D * NE * bfb
    vmem_limit = int(min(max(2 * (in_bytes + out_bytes) + tmp_bytes + (4 << 20), 16 << 20),
                         40 << 20))

    return pl.pallas_call(
        kern,
        out_shape=jax.ShapeDtypeStruct((B, NH, D, NE), jnp.bfloat16),
        grid=grid,
        in_specs=[
            pl.BlockSpec((None, None, D, NE), bh),   # q_norm frame           (bf16)
            pl.BlockSpec((None, None, D, NE), bh),   # K frame (normalized)   (bf16)
            pl.BlockSpec((None, None, D, NE), bh),   # V frame                (bf16)
            pl.BlockSpec((None, 1, NE), hh),         # per-head temp*seq_scale frame (bf16)
            pl.BlockSpec((None, D, 1), hh),          # per-head query embedding      (bf16)
            pl.BlockSpec((None, L, NE), hh),         # local rpb + padding mask      (f32)
            pl.BlockSpec((None, None, P, D), bh),    # pooled K (normalized)         (bf16)
            pl.BlockSpec((None, None, D, P), bh),    # pooled V^T                    (bf16)
            pl.BlockSpec((None, P, NE), hh),         # pooled cpb bias frame         (bf16)
            pl.BlockSpec((None, L, D), hh),          # learnable tokens^T            (bf16)
            pl.BlockSpec((None, L, 1), hh),          # learnable bias                (f32)
        ],
        out_specs=pl.BlockSpec((None, None, D, NE), bh),
        compiler_params=pltpu.CompilerParams(
            dimension_semantics=("parallel", "parallel"),
            vmem_limit_bytes=vmem_limit),
    )(qn, k, v, scale, qe, locb, kp, vpT, pb, tok, lb)


def _probe_roll_sign():
    """Resolve pltpu.roll's rotation direction at runtime with a tiny probe kernel."""
    def k(x_ref, o_ref):
        o_ref[...] = pltpu.roll(x_ref[...], shift=1, axis=1)

    x = jnp.broadcast_to(jnp.arange(128, dtype=jnp.float32), (8, 128))
    y = pl.pallas_call(k, out_shape=jax.ShapeDtypeStruct((8, 128), jnp.float32))(x)
    first = float(jax.device_get(y)[0, 0])
    # jnp.roll convention (out[i] = x[i - shift]) gives out[0, 0] == 127.
    return 1 if first > 64.0 else -1


# ------------------------------- JAX glue -------------------------------- #
def _l2norm(x, axis, eps=1e-12):
    return x / jnp.maximum(jnp.linalg.norm(x, axis=axis, keepdims=True), eps)


def layer_norm(x, g, b, eps):
    mu = x.mean(-1, keepdims=True)
    var = x.var(-1, keepdims=True)
    return (x - mu) / jnp.sqrt(var + eps) * g + b


def _agg_attn_reference(prep, deltas):
    """Pure-JAX f32 transcription of the kernel math (same prepared inputs)."""
    f32 = jnp.float32
    qn = prep["qn"].astype(f32)                                            # (B, nh, D, NE)
    qs = (qn + prep["qe"].astype(f32)[None]) * prep["scale"].astype(f32)[None]
    k = prep["k"].astype(f32)
    v = prep["v"].astype(f32)
    loc = jnp.stack(
        [jnp.sum(qs * jnp.roll(k, -d, axis=-1), axis=2) for d in deltas],
        axis=2) + prep["locb"][None].astype(f32)                           # (B, nh, L, NE)
    pool = jnp.einsum("bhpd,bhdn->bhpn", prep["kp"].astype(f32), qs) \
        + prep["pb"][None].astype(f32)                                     # (B, nh, P, NE)
    m = jnp.maximum(loc.max(axis=2), pool.max(axis=2))[:, :, None, :]
    el = jnp.exp(loc - m)
    ep = jnp.exp(pool - m)
    inv = 1.0 / (el.sum(axis=2) + ep.sum(axis=2))[:, :, None, :]
    xp = jnp.einsum("bhdp,bhpn->bhdn", prep["vpT"].astype(f32), ep) * inv
    dyn = jnp.einsum("hld,bhdn->bhln", prep["tok"].astype(f32), qn) \
        + prep["lb"][None] + el * inv
    xl = jnp.zeros_like(xp)
    for i, d in enumerate(deltas):
        xl = xl + dyn[:, :, i:i + 1, :] * jnp.roll(v, -d, axis=-1)
    return xp + xl                                                         # (B, nh, D, NE)


def make_relative_position_cpb(H, W, pool_h, pool_w):
    # Equivalent of TransNeXt's get_relative_position_cpb (host-side numpy).
    axis_qh = np.arange(H, dtype=np.float32)
    axis_kh = axis_qh.reshape(pool_h, H // pool_h).mean(-1)
    axis_qw = np.arange(W, dtype=np.float32)
    axis_kw = axis_qw.reshape(pool_w, W // pool_w).mean(-1)
    kh, kw = np.meshgrid(axis_kh, axis_kw, indexing="ij")
    qh, qw = np.meshgrid(axis_qh, axis_qw, indexing="ij")
    rel_h = (qh.reshape(-1)[:, None] - kh.reshape(-1)[None, :]) / (H - 1) * 8
    rel_w = (qw.reshape(-1)[:, None] - kw.reshape(-1)[None, :]) / (W - 1) * 8
    rel_hw = np.stack([rel_h, rel_w], axis=-1).reshape(-1, 2)
    table, idx = np.unique(rel_hw, return_inverse=True, axis=0)
    table = np.sign(table) * np.log2(np.abs(table) + 1.0) / np.log2(8.0)
    return (jnp.asarray(idx.reshape(H * W, pool_h * pool_w), jnp.int32),
            jnp.asarray(table, jnp.float32))


def aggregated_attention_forward(p, x, H, W, rel_pos_index, rel_coords_table,
                                 *, num_heads, window_size, sr_ratio,
                                 roll_sign, use_pallas=True):
    B, N, C = x.shape
    D = C // num_heads
    L = window_size ** 2
    pad = window_size // 2
    Hp, Wp = H + 2 * pad, W + 2 * pad
    Np = Hp * Wp
    pool_h, pool_w = H // sr_ratio, W // sr_ratio
    P = pool_h * pool_w

    # Frame geometry: padded grid + margin M so every neighbour offset is a pure lane shift.
    M = pad * (Wp + 1)
    NE = ((Np + 2 * M + 127) // 128) * 128     # lane-aligned frame width
    lpad, rpad = M, NE - Np - M
    deltas = [(di - pad) * Wp + (dj - pad)
              for di in range(window_size) for dj in range(window_size)]
    shifts = [((-d) % NE) if roll_sign > 0 else (d % NE) for d in deltas]

    # --- padding mask / sequence-length scale (host-side numpy, == get_seqlen_and_mask) ---
    ii, jj = np.meshgrid(np.arange(H), np.arange(W), indexing="ij")
    di, dj = np.meshgrid(np.arange(window_size), np.arange(window_size), indexing="ij")
    src_i = ii.reshape(-1, 1) + di.reshape(1, -1) - pad
    src_j = jj.reshape(-1, 1) + dj.reshape(1, -1) - pad
    valid = (src_i >= 0) & (src_i < H) & (src_j >= 0) & (src_j < W)        # (N, L)
    seq_scale_np = np.log(valid.sum(-1) + P).astype(np.float32)            # (N,)

    bf16 = jnp.bfloat16
    # Per-head scale frame: softplus(temperature) * seq_length_scale, zero on halo/margins
    # (keeps q_scaled exactly zero outside the image, matching the old explicit framing).
    seq_frame = np.zeros((Hp, Wp), np.float32)
    seq_frame[pad:pad + H, pad:pad + W] = seq_scale_np.reshape(H, W)
    seq_frame = np.pad(seq_frame.reshape(Np), (lpad, rpad))                # (NE,)
    temp = jax.nn.softplus(p["temperature"]).reshape(num_heads, 1, 1)
    scale = (temp * jnp.asarray(seq_frame, jnp.float32).reshape(1, 1, NE)).astype(bf16)
    qe = p["query_embedding"].transpose(0, 2, 1).astype(bf16)              # (nh, D, 1)

    # Local bias with the padding mask folded in (f32: -1e30 stays exact), on the frame.
    mask_frame = np.zeros((L, Hp, Wp), np.float32)
    mask_frame[:, pad:pad + H, pad:pad + W] = (~valid).astype(np.float32).T.reshape(L, H, W)
    mask_frame = np.pad(mask_frame.reshape(L, Np), ((0, 0), (lpad, rpad)))
    locb = (p["rpb_local"][:, :, None]
            + jnp.asarray(-1e30 * mask_frame, jnp.float32)[None]).astype(jnp.float32)

    # --- query path (channel-major, normalized only; scaling happens in-kernel) ---
    q = x @ p["q_w"].T + p["q_b"]
    q = q.reshape(B, N, num_heads, D).transpose(0, 2, 3, 1)                # (B, nh, D, N)
    q_norm = _l2norm(q, axis=2)

    # --- local kv path ---
    kv = x @ p["kv_w"].T + p["kv_b"]                                       # (B, N, 2C)
    k = kv[..., :C].reshape(B, N, num_heads, D).transpose(0, 2, 3, 1)      # (B, nh, D, N)
    v = kv[..., C:].reshape(B, N, num_heads, D).transpose(0, 2, 3, 1)
    k = _l2norm(k, axis=2)

    def to_frame(t):  # (B, nh, D, N) -> (B, nh, D, NE): zero halo + margins, lane-aligned.
        t = t.reshape(B, num_heads, D, H, W)
        t = jnp.pad(t, ((0, 0), (0, 0), (0, 0), (pad, pad), (pad, pad)))
        t = t.reshape(B, num_heads, D, Np)
        return jnp.pad(t, ((0, 0), (0, 0), (0, 0), (lpad, rpad)))

    qn_f = to_frame(q_norm).astype(bf16)
    k_f = to_frame(k).astype(bf16)
    v_f = to_frame(v).astype(bf16)

    # --- pooled kv path: 1x1 conv (sr) + GELU + avg pool + LayerNorm + kv ---
    x_img = x.transpose(0, 2, 1).reshape(B, C, H, W)
    x_sr = jnp.einsum("bchw,oc->bohw", x_img, p["sr_w"]) + p["sr_b"][None, :, None, None]
    x_act = jax.nn.gelu(x_sr, approximate=False)
    x_pooled = x_act.reshape(B, C, pool_h, sr_ratio, pool_w, sr_ratio).mean(axis=(3, 5))
    x_ = x_pooled.reshape(B, C, P).transpose(0, 2, 1)                      # (B, P, C)
    x_ = layer_norm(x_, p["norm_g"], p["norm_b"], 1e-5)
    kv_pool = x_ @ p["kv_w"].T + p["kv_b"]
    kv_pool = kv_pool.reshape(B, P, 2 * num_heads, D).transpose(0, 2, 1, 3)
    k_pool, v_pool = kv_pool[:, :num_heads], kv_pool[:, num_heads:]        # (B, nh, P, D)
    kp = _l2norm(k_pool, axis=-1).astype(bf16)
    vpT = v_pool.transpose(0, 1, 3, 2).astype(bf16)                        # (B, nh, D, P)

    # --- pooled relative position bias (cpb MLP), per head, laid out on the frame ---
    h1 = jax.nn.relu(rel_coords_table @ p["cpb_fc1_w"].T + p["cpb_fc1_b"])
    cpb = h1 @ p["cpb_fc2_w"].T + p["cpb_fc2_b"]                           # (T, nh)
    pool_bias = cpb.T[:, rel_pos_index.reshape(-1)].reshape(num_heads, N, P)
    pool_bias = pool_bias.transpose(0, 2, 1).reshape(num_heads, P, H, W)
    pool_bias = jnp.pad(pool_bias, ((0, 0), (0, 0), (pad, pad), (pad, pad)))
    pool_bias = pool_bias.reshape(num_heads, P, Np)
    pool_bias = jnp.pad(pool_bias, ((0, 0), (0, 0), (lpad, rpad))).astype(bf16)

    tokT = p["learnable_tokens"].transpose(0, 2, 1).astype(bf16)           # (nh, L, D)
    lb = p["learnable_bias"].transpose(0, 2, 1).astype(jnp.float32)        # (nh, L, 1)

    prep = dict(qn=qn_f, k=k_f, v=v_f, scale=scale, qe=qe, locb=locb,
                kp=kp, vpT=vpT, pb=pool_bias, tok=tokT, lb=lb)

    if use_pallas:
        core = agg_attn_pallas(prep, shifts=shifts)                        # (B, nh, D, NE) bf16
    else:
        core = _agg_attn_reference(prep, deltas)                           # f32

    # Extract interior queries from the frame and fold heads back.
    core = core[:, :, :, lpad:lpad + Np].reshape(B, num_heads, D, Hp, Wp)
    core = core[:, :, :, pad:pad + H, pad:pad + W].reshape(B, num_heads, D, N)
    out = core.transpose(0, 3, 1, 2).reshape(B, N, C)
    out = out.astype(jnp.float32) @ p["proj_w"].T + p["proj_b"]
    # TODO(synk): attn_drop / proj_drop are identity at inference; not implemented.
    return out


# ----------------------- TransNeXtStage components ------------------------ #
def patch_embed(p, x, patch_size, stride):
    y = jax.lax.conv_general_dilated(
        x, p["pe_conv_w"], window_strides=(stride, stride),
        padding=((patch_size // 2, patch_size // 2),) * 2,
        dimension_numbers=("NCHW", "OIHW", "NCHW"))
    y = y + p["pe_conv_b"][None, :, None, None]
    B, C, H, W = y.shape
    y = y.reshape(B, C, H * W).transpose(0, 2, 1)
    y = layer_norm(y, p["pe_norm_g"], p["pe_norm_b"], 1e-5)
    return y, H, W


def conv_glu(bp, x, H, W):
    B, N, _ = x.shape
    y = x @ bp["fc1_w"].T + bp["fc1_b"]
    hidden = y.shape[-1] // 2
    xg, vg = y[..., :hidden], y[..., hidden:]
    xi = xg.transpose(0, 2, 1).reshape(B, hidden, H, W)
    xi = jax.lax.conv_general_dilated(
        xi, bp["dw_w"], window_strides=(1, 1), padding=((1, 1), (1, 1)),
        dimension_numbers=("NCHW", "OIHW", "NCHW"), feature_group_count=hidden)
    xi = xi + bp["dw_b"][None, :, None, None]
    xi = xi.reshape(B, hidden, N).transpose(0, 2, 1)
    y = jax.nn.gelu(xi, approximate=False) * vg
    return y @ bp["fc2_w"].T + bp["fc2_b"]


def transnext_stage_forward(p, x, cfg, rel_pos_index, rel_coords_table,
                            roll_sign, use_pallas=True):
    # TODO(synk): the sr_ratio == 1 branch (plain Attention) is not implemented; this stage
    #             configuration uses AggregatedAttention (sr_ratio > 1), like the reference.
    y, H, W = patch_embed(p, x, cfg["patch_size"], cfg["stride"])
    B = x.shape[0]
    for bp in p["blocks"]:
        a = layer_norm(y, bp["norm1_g"], bp["norm1_b"], 1e-6)
        a = aggregated_attention_forward(
            bp, a, H, W, rel_pos_index, rel_coords_table,
            num_heads=cfg["num_heads"], window_size=cfg["window_size"],
            sr_ratio=cfg["sr_ratio"], roll_sign=roll_sign, use_pallas=use_pallas)
        y = y + a                                   # drop_path identity at inference
        m = layer_norm(y, bp["norm2_g"], bp["norm2_b"], 1e-6)
        y = y + conv_glu(bp, m, H, W)
    y = layer_norm(y, p["final_norm_g"], p["final_norm_b"], 1e-6)
    C = y.shape[-1]
    return y.reshape(B, H, W, C).transpose(0, 3, 1, 2)


def _tn(k, shape, std=0.02):
    return std * jax.random.truncated_normal(k, -2.0, 2.0, shape, jnp.float32)


def init_params(key, cfg):
    C = cfg["embed_dim"]
    nh = cfg["num_heads"]
    D = C // nh
    L = cfg["window_size"] ** 2
    glu_hidden = int(2 * int(C * cfg["mlp_ratio"]) / 3)
    keys = iter(jax.random.split(key, 256))
    p = {
        "pe_conv_w": _tn(next(keys), (C, cfg["in_channels"], cfg["patch_size"], cfg["patch_size"])),
        "pe_conv_b": jnp.zeros((C,), jnp.float32),
        "pe_norm_g": jnp.ones((C,), jnp.float32), "pe_norm_b": jnp.zeros((C,), jnp.float32),
        "final_norm_g": jnp.ones((C,), jnp.float32), "final_norm_b": jnp.zeros((C,), jnp.float32),
        "blocks": [],
    }
    for _ in range(cfg["depth"]):
        bp = {
            "norm1_g": jnp.ones((C,), jnp.float32), "norm1_b": jnp.zeros((C,), jnp.float32),
            "norm2_g": jnp.ones((C,), jnp.float32), "norm2_b": jnp.zeros((C,), jnp.float32),
            "temperature": jnp.log(jnp.exp(jnp.ones((nh, 1, 1), jnp.float32) / 0.24) - 1.0),
            "q_w": _tn(next(keys), (C, C)), "q_b": jnp.zeros((C,), jnp.float32),
            "query_embedding": _tn(next(keys), (nh, 1, D)),
            "kv_w": _tn(next(keys), (2 * C, C)), "kv_b": jnp.zeros((2 * C,), jnp.float32),
            "proj_w": _tn(next(keys), (C, C)), "proj_b": jnp.zeros((C,), jnp.float32),
            "sr_w": _tn(next(keys), (C, C)), "sr_b": jnp.zeros((C,), jnp.float32),
            "norm_g": jnp.ones((C,), jnp.float32), "norm_b": jnp.zeros((C,), jnp.float32),
            "cpb_fc1_w": _tn(next(keys), (512, 2)), "cpb_fc1_b": jnp.zeros((512,), jnp.float32),
            "cpb_fc2_w": _tn(next(keys), (nh, 512)), "cpb_fc2_b": jnp.zeros((nh,), jnp.float32),
            "rpb_local": _tn(next(keys), (nh, L), 0.0004),
            "learnable_tokens": _tn(next(keys), (nh, D, L)),
            "learnable_bias": jnp.zeros((nh, 1, L), jnp.float32),
            "fc1_w": _tn(next(keys), (2 * glu_hidden, C)),
            "fc1_b": jnp.zeros((2 * glu_hidden,), jnp.float32),
            "dw_w": _tn(next(keys), (glu_hidden, 1, 3, 3)),
            "dw_b": jnp.zeros((glu_hidden,), jnp.float32),
            "fc2_w": _tn(next(keys), (C, glu_hidden)), "fc2_b": jnp.zeros((C,), jnp.float32),
        }
        p["blocks"].append(bp)
    return p


if __name__ == "__main__":
    cfg = dict(input_resolution=(8, 8), sr_ratio=2, patch_size=3, stride=2,
               in_channels=4, embed_dim=16, num_heads=2, window_size=3,
               mlp_ratio=2.0, depth=2)
    B = 2

    key = jax.random.PRNGKey(0)
    kx, kparams = jax.random.split(key)
    x = jax.random.normal(kx, (B, cfg["in_channels"], 16, 16), jnp.float32)
    params = init_params(kparams, cfg)

    Hr, Wr = cfg["input_resolution"]
    rel_pos_index, rel_coords_table = make_relative_position_cpb(
        Hr, Wr, Hr // cfg["sr_ratio"], Wr // cfg["sr_ratio"])

    roll_sign = _probe_roll_sign()

    # --- correctness check: Pallas attention core vs. a pure-JAX f32 transcription ---
    # (bf16 storage/compute in the kernel and the approx reciprocal give ~1e-2-level relative
    #  error vs. the f32 reference; this is expected and acceptable for inference.)
    y_emb, H, W = patch_embed(params, x, cfg["patch_size"], cfg["stride"])
    assert (H, W) == tuple(cfg["input_resolution"])
    bp0 = params["blocks"][0]
    a_in = layer_norm(y_emb, bp0["norm1_g"], bp0["norm1_b"], 1e-6)
    attn_kwargs = dict(num_heads=cfg["num_heads"], window_size=cfg["window_size"],
                       sr_ratio=cfg["sr_ratio"], roll_sign=roll_sign)
    a_pl = aggregated_attention_forward(bp0, a_in, H, W, rel_pos_index, rel_coords_table,
                                        use_pallas=True, **attn_kwargs)
    a_ref = aggregated_attention_forward(bp0, a_in, H, W, rel_pos_index, rel_coords_table,
                                         use_pallas=False, **attn_kwargs)
    a_pl, a_ref = jax.block_until_ready((a_pl, a_ref))
    rel_err = float(jnp.max(jnp.abs(a_pl - a_ref)) / (jnp.max(jnp.abs(a_ref)) + 1e-9))
    assert rel_err < 5e-2, f"Pallas attention mismatch vs reference: rel_err={rel_err:.3e}"

    # --- full stage forward through the Pallas path ---
    y = transnext_stage_forward(params, x, cfg, rel_pos_index, rel_coords_table,
                                roll_sign, use_pallas=True)
    y = jax.block_until_ready(y)
    assert y.shape == (B, cfg["embed_dim"], H, W), y.shape
    assert bool(jnp.all(jnp.isfinite(y)))
    print("KERNEL_OK")
</pallas_src>

<mosaic_0001>
module attributes {stable_mosaic.version = 11 : i64} {
  func.func @k(%arg0: memref<8x128xf32, #tpu.memory_space<vmem>>, %arg1: memref<8x128xf32, #tpu.memory_space<vmem>>) attributes {dimension_semantics = [], scalar_prefetch = 0 : i64, scratch_operands = 0 : i64, tpu.core_type = #tpu.core_type<tc>} {
    %c0 = arith.constant 0 : index
    %c0_0 = arith.constant 0 : index
    %0 = vector.load %arg0[%c0, %c0_0] : memref<8x128xf32, #tpu.memory_space<vmem>>, vector<8x128xf32>
    %c1_i32 = arith.constant 1 : i32
    %1 = tpu.dynamic_rotate %0 by %c1_i32 dim 1 : vector<8x128xf32>, i32 -> vector<8x128xf32>
    %c0_1 = arith.constant 0 : index
    %c0_2 = arith.constant 0 : index
    %2 = vector.load %arg1[%c0_1, %c0_2] : memref<8x128xf32, #tpu.memory_space<vmem>>, vector<8x128xf32>
    tpu.vector_store %arg1[%c0_1, %c0_2], %1 {strides = array<i32>} : memref<8x128xf32, #tpu.memory_space<vmem>>, vector<8x128xf32>,
    return
  }
}

</mosaic_0001>

<llo_original>
// kernel: tpu_custom_call.1
$region0: #{tpu_custom_call.1}
  #allocation0 [shape = 'u32[]', space=smem, size = 0x4, offset = 0x4, fixed_abs, tag = 'smem constant byte address 0x4 - core index']
  #allocation1 [shape = 'u32[144,128]{1,0:T(1,128)}', space=vmem, size = 0x12000, scoped, tag = 'internal scratch']
  %s0 = inlined_call_operand.hbm [shape: f32[8,128], index: 0, kind: input, shape index: {}]
  %s1 = inlined_call_operand.hbm [shape: f32[8,128], index: 1, kind: output, shape index: {}]
  %s2 = sld [smem:[#allocation0]]
  $region18: #{tpu_custom_call.1} parent=0
    _
  %s4 = ssub.s32 1, %s2
  %s5 = scalar_select 0, %s4, %s2
  $region1: #{tpu_custom_call.1} parent=0
    #allocation2 [shape = 'u8[4096]{0}', space=vmem, size = 0x1000, scoped, tag = 'input window, operand 0, single buffered']
    #allocation3 [shape = 's32[1]{0}', space=sflag, size = 0x4, scoped, tag = 'scoped memory for tpu_custom_call.1']
    #allocation4 [shape = 's32[1]{0}', space=sflag, size = 0x4, scoped, tag = 'scoped memory for tpu_custom_call.1']
    #allocation5 [shape = 'u8[4096]{0}', space=vmem, size = 0x1000, scoped, tag = 'output window, operand 0, single buffered']
    %6 = vsyncpa [#allocation3], 0
    %7 = vsyncpa [#allocation4], 0
    // Predicated region
    $region2: #{tpu_custom_call.1} parent=1 // pred_check
      _
    $region3: #{tpu_custom_call.1} parent=1 // pred_check_branch
      %9 = sbr.rel (0) target = $region5
    $region4: #{tpu_custom_call.1} parent=1 // pred_region
      %s11 = ssub.s32 128, 128
      %12 = vsyncadd [#allocation3], %s11
      %s14 = sshll.u32 [#allocation2], 4
      %s15 = int_to_ptr.vmem [resolvable:$true] %s14
      %17 = dma.hbm_to_vmem [thread:$0]  %s0, 128, %s15, [#allocation3]
    $region5: #{tpu_custom_call.1} parent=1 // pred_fallthru
      _
    // Predicated region
    $region6: #{tpu_custom_call.1} parent=1 // pred_check
      _
    $region7: #{tpu_custom_call.1} parent=1 // pred_check_branch
      %19 = sbr.rel (0) target = $region9
    $region8: #{tpu_custom_call.1} parent=1 // pred_region
      %20 = dma.done [#allocation3], 128
    $region9: #{tpu_custom_call.1} parent=1 // pred_fallthru
      _
    %v21 = vld [vmem:[#allocation2] sm:$0xff]
    %22 = vrot.lane.b32.xlu0 %v21, 1
    %v23 = vpop.permute.xlu0 %22
    %24 = vst [vmem:[#allocation5] sm:$0xff] %v23
    // Predicated region
    $region10: #{tpu_custom_call.1} parent=1 // pred_check
      _
    $region11: #{tpu_custom_call.1} parent=1 // pred_check_branch
      %26 = sbr.rel (0) target = $region13
    $region12: #{tpu_custom_call.1} parent=1 // pred_region
      %s28 = ssub.s32 128, 128
      %29 = vsyncadd [#allocation4], %s28
      %s31 = sshll.u32 [#allocation5], 4
      %s32 = int_to_ptr.vmem [resolvable:$true] %s31
      %34 = dma.vmem_to_hbm [thread:$0]  %s32, 128, %s1, [#allocation4]
    $region13: #{tpu_custom_call.1} parent=1 // pred_fallthru
      _
    // Predicated region
    $region14: #{tpu_custom_call.1} parent=1 // pred_check
      _
    $region15: #{tpu_custom_call.1} parent=1 // pred_check_branch
      %36 = sbr.rel (0) target = $region17
    $region16: #{tpu_custom_call.1} parent=1 // pred_region
      %37 = dma.done [#allocation4], 128
    $region17: #{tpu_custom_call.1} parent=1 // pred_fallthru
      _
    %38 = vsyncpa [#allocation3], 1
    %39 = vsyncpa [#allocation4], 1

</llo_original>
